<compile_context>
chip_gen: v7x
topology: tpu7x:2x2x1
jax: 0.10.0
libtpu: 0.0.40
codegen_flags: <defaults>
</compile_context>

<pallas_src>
import jax
import jax.numpy as jnp
from jax.experimental import pallas as pl
from jax.experimental.pallas import tpu as pltpu

_SUBLANE = 8


def _round_up(n, m):
    return ((n + m - 1) // m) * m


def _anfis_compute(x_ref, m1_ref, m2_ref, bias_ref, w_ref):
    """Shared compute for one (TB, D) batch tile."""
    x = x_ref[...]                                   # (TB, D)

    # q[b,r] = -sum_d (x[b,d]-c[r,d])^2 / (2*sigma[r,d]^2), built on the MXU:
    #   q = (x*x) @ (-A)^T + x @ (2cA)^T - sum_d c^2 A      (signs pre-folded)
    q = jnp.dot(x * x, m1_ref[...], preferred_element_type=jnp.float32)
    q = q + jnp.dot(x, m2_ref[...], preferred_element_type=jnp.float32)
    q = q + bias_ref[...]

    rs = jnp.exp(q)                                  # (TB, R) — one EUP pass

    denom = jnp.sum(rs, axis=1, keepdims=True) + 1e-6
    ns = rs * pl.reciprocal(denom, approx=False)     # (TB, R)

    out = jnp.dot(ns, w_ref[...], preferred_element_type=jnp.float32)  # (TB, O)
    return out, rs, ns


def _anfis_kernel_full(x_ref, m1_ref, m2_ref, bias_ref, w_ref,
                       out_ref, rs_ref, ns_ref):
    out, rs, ns = _anfis_compute(x_ref, m1_ref, m2_ref, bias_ref, w_ref)
    out_ref[...] = out
    rs_ref[...] = rs
    ns_ref[...] = ns


def _anfis_kernel_out_only(x_ref, m1_ref, m2_ref, bias_ref, w_ref, out_ref):
    out, _, _ = _anfis_compute(x_ref, m1_ref, m2_ref, bias_ref, w_ref)
    out_ref[...] = out


def anfis_forward(x, centers, sigmas, output_coeffs, *,
                  batch_tile=4096, return_strengths=True):
    """x: (B, D); centers/sigmas: (R, D); output_coeffs: (R, O).

    Returns (output, rule_strengths, normalized_strengths) like the PyTorch
    module (the latter two are None when return_strengths=False).
    """
    x = jnp.asarray(x, jnp.float32)
    centers = jnp.asarray(centers, jnp.float32)
    sigmas = jnp.asarray(sigmas, jnp.float32)
    output_coeffs = jnp.asarray(output_coeffs, jnp.float32)

    B, D = x.shape
    R, O = output_coeffs.shape

    # ---- precomputed parameters (signs / bias folded in) --------------------
    a = 1.0 / (2.0 * sigmas * sigmas)                      # (R, D)
    m1 = (-a).T                                            # (D, R)
    m2 = (2.0 * centers * a).T                             # (D, R)
    bias = (-jnp.sum(centers * centers * a, axis=1)).reshape(1, R)

    # ---- batch tiling --------------------------------------------------------
    # Multiple of 8 (sublane), capped by batch_tile, and capped at ceil(B/2)
    # so the grid has >=2 steps whenever B allows (v7x megacore occupancy).
    TB = min(batch_tile, _round_up(max(pl.cdiv(B, 2), 1), _SUBLANE))
    TB = max(TB, _SUBLANE)
    Bp = _round_up(B, TB)
    x_p = x if Bp == B else jnp.pad(x, ((0, Bp - B), (0, 0)))
    grid = (Bp // TB,)

    def batch_spec(cols):
        return pl.BlockSpec((TB, cols), lambda i: (i, 0))

    def resident(shape):
        return pl.BlockSpec(shape, lambda i: (0, 0))

    in_specs = [
        batch_spec(D),      # x tile
        resident((D, R)),   # -A^T
        resident((D, R)),   # (2cA)^T
        resident((1, R)),   # -sum_d c^2 A
        resident((R, O)),   # output coefficients
    ]
    compiler_params = pltpu.CompilerParams(
        dimension_semantics=("parallel",),
        vmem_limit_bytes=32 * 1024 * 1024,
    )

    if return_strengths:
        out_p, rs_p, ns_p = pl.pallas_call(
            _anfis_kernel_full,
            out_shape=(
                jax.ShapeDtypeStruct((Bp, O), jnp.float32),   # output
                jax.ShapeDtypeStruct((Bp, R), jnp.float32),   # rule_strengths
                jax.ShapeDtypeStruct((Bp, R), jnp.float32),   # normalized_strengths
            ),
            grid=grid,
            in_specs=in_specs,
            out_specs=(batch_spec(O), batch_spec(R), batch_spec(R)),
            compiler_params=compiler_params,
        )(x_p, m1, m2, bias, output_coeffs)
        if Bp != B:
            out_p, rs_p, ns_p = out_p[:B], rs_p[:B], ns_p[:B]
        return out_p, rs_p, ns_p

    out_p = pl.pallas_call(
        _anfis_kernel_out_only,
        out_shape=jax.ShapeDtypeStruct((Bp, O), jnp.float32),
        grid=grid,
        in_specs=in_specs,
        out_specs=batch_spec(O),
        compiler_params=compiler_params,
    )(x_p, m1, m2, bias, output_coeffs)
    if Bp != B:
        out_p = out_p[:B]
    return out_p, None, None


def anfis_reference(x, centers, sigmas, output_coeffs):
    """Pure-JAX reference mirroring the PyTorch forward exactly."""
    memb = jnp.exp(-((x[:, None, :] - centers[None, :, :]) ** 2)
                   / (2.0 * sigmas[None, :, :] ** 2))          # (B, R, D)
    rs = jnp.prod(memb, axis=2)                                 # (B, R)
    ns = rs / (jnp.sum(rs, axis=1, keepdims=True) + 1e-6)       # (B, R)
    out = ns @ output_coeffs                                    # (B, O)
    return out, rs, ns


if __name__ == "__main__":
    # Small shapes consistent with the module: input_dim=4, num_rules=16, output_dim=8.
    B, D, R, O = 8, 4, 16, 8

    key = jax.random.PRNGKey(0)
    kx, kc, kw = jax.random.split(key, 3)

    x = jax.random.normal(kx, (B, D), dtype=jnp.float32)
    centers = jax.random.normal(kc, (R, D), dtype=jnp.float32)        # membership centers
    sigmas = jnp.ones((R, D), dtype=jnp.float32)                      # membership widths
    output_coeffs = jax.random.normal(kw, (R, O), dtype=jnp.float32)  # torch.randn(num_rules, output_dim)

    out, rs, ns = anfis_forward(x, centers, sigmas, output_coeffs)
    jax.block_until_ready((out, rs, ns))

    ref_out, ref_rs, ref_ns = anfis_reference(x, centers, sigmas, output_coeffs)
    assert jnp.allclose(out, ref_out, rtol=1e-4, atol=1e-5)
    assert jnp.allclose(rs, ref_rs, rtol=1e-4, atol=1e-5)
    assert jnp.allclose(ns, ref_ns, rtol=1e-4, atol=1e-5)

    # Output-only path (rs/ns not written back to HBM).
    out_only, _, _ = anfis_forward(x, centers, sigmas, output_coeffs,
                                   return_strengths=False)
    jax.block_until_ready(out_only)
    assert jnp.allclose(out_only, ref_out, rtol=1e-4, atol=1e-5)

    # TODO(synk): update_output_coeffs uses torch.linalg.pinv (LSE solve); it is a
    # training-time host-side op, not part of the forward kernel.
    print("KERNEL_OK")
</pallas_src>

<mosaic_0001>
module attributes {stable_mosaic.version = 11 : i64} {
  func.func @_anfis_kernel_full(%arg0: i32, %arg1: memref<8x4xf32, #tpu.memory_space<vmem>>, %arg2: memref<4x16xf32, #tpu.memory_space<vmem>>, %arg3: memref<4x16xf32, #tpu.memory_space<vmem>>, %arg4: memref<1x16xf32, #tpu.memory_space<vmem>>, %arg5: memref<16x8xf32, #tpu.memory_space<vmem>>, %arg6: memref<8x8xf32, #tpu.memory_space<vmem>>, %arg7: memref<8x16xf32, #tpu.memory_space<vmem>>, %arg8: memref<8x16xf32, #tpu.memory_space<vmem>>) attributes {dimension_semantics = [#tpu.dimension_semantics<parallel>], iteration_bounds = array<i64: 1>, scalar_prefetch = 0 : i64, scratch_operands = 0 : i64, tpu.core_type = #tpu.core_type<tc>, window_params = [{transform_indices = @transform_0, window_bounds = array<i64: 8, 4>}, {pipeline_mode = #tpu.pipeline_mode<synchronous>, transform_indices = @transform_1, window_bounds = array<i64: 4, 16>}, {pipeline_mode = #tpu.pipeline_mode<synchronous>, transform_indices = @transform_2, window_bounds = array<i64: 4, 16>}, {pipeline_mode = #tpu.pipeline_mode<synchronous>, transform_indices = @transform_3, window_bounds = array<i64: 1, 16>}, {pipeline_mode = #tpu.pipeline_mode<synchronous>, transform_indices = @transform_4, window_bounds = array<i64: 16, 8>}, {transform_indices = @transform_5, window_bounds = array<i64: 8, 8>}, {transform_indices = @transform_6, window_bounds = array<i64: 8, 16>}, {transform_indices = @transform_7, window_bounds = array<i64: 8, 16>}]} {
    %c0 = arith.constant 0 : index
    %c0_0 = arith.constant 0 : index
    %0 = vector.load %arg1[%c0, %c0_0] : memref<8x4xf32, #tpu.memory_space<vmem>>, vector<8x4xf32>
    %1 = arith.mulf %0, %0 : vector<8x4xf32>
    %c0_1 = arith.constant 0 : index
    %c0_2 = arith.constant 0 : index
    %2 = vector.load %arg2[%c0_1, %c0_2] : memref<4x16xf32, #tpu.memory_space<vmem>>, vector<4x16xf32>
    %cst = arith.constant dense<0.000000e+00> : vector<8x16xf32>
    %3 = tpu.matmul %1, %2, %cst {dimension_numbers = #tpu.dot_dimension_numbers<[1], [0], [0], [1], [0, 0, 1, 1], [], []>} : vector<8x4xf32>, vector<4x16xf32>, vector<8x16xf32> -> vector<8x16xf32>
    %c0_3 = arith.constant 0 : index
    %c0_4 = arith.constant 0 : index
    %4 = vector.load %arg3[%c0_3, %c0_4] : memref<4x16xf32, #tpu.memory_space<vmem>>, vector<4x16xf32>
    %cst_5 = arith.constant dense<0.000000e+00> : vector<8x16xf32>
    %5 = tpu.matmul %0, %4, %cst_5 {dimension_numbers = #tpu.dot_dimension_numbers<[1], [0], [0], [1], [0, 0, 1, 1], [], []>} : vector<8x4xf32>, vector<4x16xf32>, vector<8x16xf32> -> vector<8x16xf32>
    %6 = arith.addf %3, %5 : vector<8x16xf32>
    %c0_6 = arith.constant 0 : index
    %c0_7 = arith.constant 0 : index
    %7 = vector.load %arg4[%c0_6, %c0_7] : memref<1x16xf32, #tpu.memory_space<vmem>>, vector<1x16xf32>
    %8 = vector.broadcast %7 : vector<1x16xf32> to vector<8x16xf32>
    %9 = arith.addf %6, %8 : vector<8x16xf32>
    %10 = math.exp %9 : vector<8x16xf32>
    %cst_8 = arith.constant dense<0.000000e+00> : vector<8xf32>
    %11 = vector.multi_reduction <add>, %10, %cst_8 [1] : vector<8x16xf32> to vector<8xf32>
    %12 = vector.shape_cast %11 : vector<8xf32> to vector<8x1xf32>
    %cst_9 = arith.constant 9.99999997E-7 : f32
    %13 = vector.broadcast %cst_9 : f32 to vector<8x1xf32>
    %14 = arith.addf %12, %13 : vector<8x1xf32>
    %15 = tpu.reciprocal %14 : vector<8x1xf32> -> vector<8x1xf32>
    %16 = vector.broadcast %15 : vector<8x1xf32> to vector<8x16xf32>
    %17 = arith.mulf %10, %16 : vector<8x16xf32>
    %c0_10 = arith.constant 0 : index
    %c0_11 = arith.constant 0 : index
    %18 = vector.load %arg5[%c0_10, %c0_11] : memref<16x8xf32, #tpu.memory_space<vmem>>, vector<16x8xf32>
    %cst_12 = arith.constant dense<0.000000e+00> : vector<8x8xf32>
    %19 = tpu.matmul %17, %18, %cst_12 {dimension_numbers = #tpu.dot_dimension_numbers<[1], [0], [0], [1], [0, 0, 1, 1], [], []>} : vector<8x16xf32>, vector<16x8xf32>, vector<8x8xf32> -> vector<8x8xf32>
    %c0_13 = arith.constant 0 : index
    %c0_14 = arith.constant 0 : index
    %20 = vector.load %arg6[%c0_13, %c0_14] : memref<8x8xf32, #tpu.memory_space<vmem>>, vector<8x8xf32>
    tpu.vector_store %arg6[%c0_13, %c0_14], %19 {strides = array<i32>} : memref<8x8xf32, #tpu.memory_space<vmem>>, vector<8x8xf32>,
    %c0_15 = arith.constant 0 : index
    %c0_16 = arith.constant 0 : index
    %21 = vector.load %arg7[%c0_15, %c0_16] : memref<8x16xf32, #tpu.memory_space<vmem>>, vector<8x16xf32>
    tpu.vector_store %arg7[%c0_15, %c0_16], %10 {strides = array<i32>} : memref<8x16xf32, #tpu.memory_space<vmem>>, vector<8x16xf32>,
    %c0_17 = arith.constant 0 : index
    %c0_18 = arith.constant 0 : index
    %22 = vector.load %arg8[%c0_17, %c0_18] : memref<8x16xf32, #tpu.memory_space<vmem>>, vector<8x16xf32>
    tpu.vector_store %arg8[%c0_17, %c0_18], %17 {strides = array<i32>} : memref<8x16xf32, #tpu.memory_space<vmem>>, vector<8x16xf32>,
    return
  }
  func.func @transform_0(%arg0: i32) -> (i32, i32) {
    %c0_i32 = arith.constant 0 : i32
    %c0_i32_0 = arith.constant 0 : i32
    return %arg0, %c0_i32 : i32, i32
  }
  func.func @transform_1(%arg0: i32) -> (i32, i32) {
    %c0_i32 = arith.constant 0 : i32
    %c0_i32_0 = arith.constant 0 : i32
    %c0_i32_1 = arith.constant 0 : i32
    return %c0_i32, %c0_i32_0 : i32, i32
  }
  func.func @transform_2(%arg0: i32) -> (i32, i32) {
    %c0_i32 = arith.constant 0 : i32
    %c0_i32_0 = arith.constant 0 : i32
    %c0_i32_1 = arith.constant 0 : i32
    return %c0_i32, %c0_i32_0 : i32, i32
  }
  func.func @transform_3(%arg0: i32) -> (i32, i32) {
    %c0_i32 = arith.constant 0 : i32
    %c0_i32_0 = arith.constant 0 : i32
    %c0_i32_1 = arith.constant 0 : i32
    return %c0_i32, %c0_i32_0 : i32, i32
  }
  func.func @transform_4(%arg0: i32) -> (i32, i32) {
    %c0_i32 = arith.constant 0 : i32
    %c0_i32_0 = arith.constant 0 : i32
    %c0_i32_1 = arith.constant 0 : i32
    return %c0_i32, %c0_i32_0 : i32, i32
  }
  func.func @transform_5(%arg0: i32) -> (i32, i32) {
    %c0_i32 = arith.constant 0 : i32
    %c0_i32_0 = arith.constant 0 : i32
    return %arg0, %c0_i32 : i32, i32
  }
  func.func @transform_6(%arg0: i32) -> (i32, i32) {
    %c0_i32 = arith.constant 0 : i32
    %c0_i32_0 = arith.constant 0 : i32
    return %arg0, %c0_i32 : i32, i32
  }
  func.func @transform_7(%arg0: i32) -> (i32, i32) {
    %c0_i32 = arith.constant 0 : i32
    %c0_i32_0 = arith.constant 0 : i32
    return %arg0, %c0_i32 : i32, i32
  }
}

</mosaic_0001>

<llo_original>
// kernel: tpu_custom_call.1
$region0: #{tpu_custom_call.1}
  #allocation0 [shape = 'u32[]', space=smem, size = 0x4, offset = 0x4, fixed_abs, tag = 'smem constant byte address 0x4 - core index']
  #allocation1 [shape = 'u32[144,128]{1,0:T(1,128)}', space=vmem, size = 0x12000, scoped, tag = 'internal scratch']
  %s0 = inlined_call_operand.vmem [shape: f32[8,4], index: 0, kind: input, shape index: {}]
  %s1 = inlined_call_operand.vmem [shape: f32[4,16], index: 1, kind: input, shape index: {}]
  %s2 = inlined_call_operand.vmem [shape: f32[4,16], index: 2, kind: input, shape index: {}]
  %s3 = inlined_call_operand.vmem [shape: f32[1,16], index: 3, kind: input, shape index: {}]
  %s4 = inlined_call_operand.vmem [shape: f32[16,8], index: 4, kind: input, shape index: {}]
  %s5 = inlined_call_operand.hbm [shape: f32[8,8], index: 5, kind: output, shape index: {0}]
  %s6 = inlined_call_operand.hbm [shape: f32[8,16], index: 6, kind: output, shape index: {1}]
  %s7 = inlined_call_operand.hbm [shape: f32[8,16], index: 7, kind: output, shape index: {2}]
  %8 = xla_tuple %s5, %s6, %s7
  %s9 = sld [smem:[#allocation0]]
  $region46: #{tpu_custom_call.1} parent=0
    _
  %s11 = ssub.s32 1, %s9
  %s12 = scalar_select 0, %s11, %s9
  $region1: #{tpu_custom_call.1} parent=0
    #allocation2 [shape = 'u8[4096]{0}', space=vmem, size = 0x1000, scoped, tag = 'output window, operand 0, single buffered']
    #allocation3 [shape = 's32[1]{0}', space=sflag, size = 0x4, scoped, tag = 'scoped memory for tpu_custom_call.1']
    #allocation4 [shape = 'u8[4096]{0}', space=vmem, size = 0x1000, scoped, tag = 'output window, operand 1, single buffered']
    #allocation5 [shape = 's32[1]{0}', space=sflag, size = 0x4, scoped, tag = 'scoped memory for tpu_custom_call.1']
    #allocation6 [shape = 'u8[4096]{0}', space=vmem, size = 0x1000, scoped, tag = 'output window, operand 2, single buffered']
    %13 = vsyncpa [#allocation3], 0
    %14 = vsyncpa [#allocation5], 0
    // Predicated region
    $region2: #{tpu_custom_call.1} parent=1 // pred_check
      _
    $region3: #{tpu_custom_call.1} parent=1 // pred_check_branch
      %16 = sbr.rel (0) target = $region5
    $region4: #{tpu_custom_call.1} parent=1 // pred_region
      _
    $region5: #{tpu_custom_call.1} parent=1 // pred_fallthru
      _
    // Predicated region
    $region6: #{tpu_custom_call.1} parent=1 // pred_check
      _
    $region7: #{tpu_custom_call.1} parent=1 // pred_check_branch
      %18 = sbr.rel (0) target = $region9
    $region8: #{tpu_custom_call.1} parent=1 // pred_region
      _
    $region9: #{tpu_custom_call.1} parent=1 // pred_fallthru
      _
    // Predicated region
    $region10: #{tpu_custom_call.1} parent=1 // pred_check
      _
    $region11: #{tpu_custom_call.1} parent=1 // pred_check_branch
      %20 = sbr.rel (0) target = $region13
    $region12: #{tpu_custom_call.1} parent=1 // pred_region
      _
    $region13: #{tpu_custom_call.1} parent=1 // pred_fallthru
      _
    // Predicated region
    $region14: #{tpu_custom_call.1} parent=1 // pred_check
      _
    $region15: #{tpu_custom_call.1} parent=1 // pred_check_branch
      %22 = sbr.rel (0) target = $region17
    $region16: #{tpu_custom_call.1} parent=1 // pred_region
      _
    $region17: #{tpu_custom_call.1} parent=1 // pred_fallthru
      _
    // Predicated region
    $region18: #{tpu_custom_call.1} parent=1 // pred_check
      _
    $region19: #{tpu_custom_call.1} parent=1 // pred_check_branch
      %24 = sbr.rel (0) target = $region21
    $region20: #{tpu_custom_call.1} parent=1 // pred_region
      _
    $region21: #{tpu_custom_call.1} parent=1 // pred_fallthru
      _
    %v25 = vld [vmem:[%s0] sm:$0xff]
    %v26 = vmul.f32 %v25, %v25
    %v27 = vld [vmem:[%s1] sm:$0xf]
    %v28 = vld [vmem:[%s2] sm:$0xf]
    %vm29 = vcmask 31744
    %v31 = vsel %vm29, %v25, 0
    %vm33 = vcmask 1043456
    %v35 = vsel %vm33, %v28, 0
    %37 = vmatprep.subr.mxu0 0.0
    %38 = vmatpush1.msra.mxu0 %v35
    %39 = vmatprep.subr.mxu0 0.0
    %40 = vmatpush1.msra.mxu0 0.0
    %41 = vmatprep.subr.mxu0 0.0
    %42 = vmatpush1.msra.mxu0 0.0
    %43 = vmatprep.subr.mxu0 0.0
    %44 = vmatpush1.msra.mxu0 0.0
    %45 = vmatprep.subr.mxu0 0.0
    %46 = vmatpush1.msra.mxu0 0.0
    %47 = vmatprep.subr.mxu0 0.0
    %48 = vmatpush1.msra.mxu0 0.0
    %49 = vmatprep.subr.mxu0 0.0
    %50 = vmatpush1.msra.mxu0 0.0
    %51 = vmatprep.subr.mxu0 0.0
    %52 = vmatpush1.msra.mxu0 0.0
    %53 = vmatprep.subr.mxu0 0.0
    %54 = vmatpush1.msra.mxu0 0.0
    %55 = vmatprep.subr.mxu0 0.0
    %56 = vmatpush1.msra.mxu0 0.0
    %57 = vmatprep.subr.mxu0 0.0
    %58 = vmatpush1.msra.mxu0 0.0
    %59 = vmatprep.subr.mxu0 0.0
    %60 = vmatpush1.msra.mxu0 0.0
    %61 = vmatprep.subr.mxu0 0.0
    %62 = vmatpush1.msra.mxu0 0.0
    %63 = vmatprep.subr.mxu0 0.0
    %64 = vmatpush1.msra.mxu0 0.0
    %65 = vmatprep.subr.mxu0 0.0
    %66 = vmatpush1.msra.mxu0 0.0
    %67 = vmatprep.subr.mxu0 0.0
    %68 = vmatpush1.msra.mxu0 0.0
    %69 = vmatprep.subr.mxu0 0.0
    %70 = vmatpush1.msra.mxu0 0.0
    %71 = vmatprep.subr.mxu0 0.0
    %72 = vmatpush1.msra.mxu0 0.0
    %73 = vmatprep.subr.mxu0 0.0
    %74 = vmatpush1.msra.mxu0 0.0
    %75 = vmatprep.subr.mxu0 0.0
    %76 = vmatpush1.msra.mxu0 0.0
    %77 = vmatprep.subr.mxu0 0.0
    %78 = vmatpush1.msra.mxu0 0.0
    %79 = vmatprep.subr.mxu0 0.0
    %80 = vmatpush1.msra.mxu0 0.0
    %81 = vmatprep.subr.mxu0 0.0
    %82 = vmatpush1.msra.mxu0 0.0
    %83 = vmatprep.subr.mxu0 0.0
    %84 = vmatpush1.msra.mxu0 0.0
    %85 = vmatprep.subr.mxu0 0.0
    %86 = vmatpush1.msra.mxu0 0.0
    %87 = vmatprep.subr.mxu0 0.0
    %88 = vmatpush1.msra.mxu0 0.0
    %89 = vmatprep.subr.mxu0 0.0
    %90 = vmatpush1.msra.mxu0 0.0
    %91 = vmatprep.subr.mxu0 0.0
    %92 = vmatpush1.msra.mxu0 0.0
    %93 = vmatprep.subr.mxu0 0.0
    %94 = vmatpush1.msra.mxu0 0.0
    %95 = vmatprep.subr.mxu0 0.0
    %96 = vmatpush1.msra.mxu0 0.0
    %97 = vmatprep.subr.mxu0 0.0
    %98 = vmatpush1.msra.mxu0 0.0
    %99 = vmatprep.subr.mxu0 0.0
    %100 = vmatpush1.msra.mxu0 0.0
    %101 = vmatprep.mubr.f32.mxu0 0.0
    %102 = vmatmul.mubr.f32.gmra.mrb[0].mxu0 %v31
    %v103 = vpop.f32.mrb[0].mxu0
    %v104 = vadd.f32 0.0, %v103
    %v105 = vpop.f32.mrb[0].mxu0
    %106 = vdwg.mxu0
    %v108 = vsel %vm29, %v26, 0
    %v111 = vsel %vm33, %v27, 0
    %113 = vmatprep.subr.mxu0 0.0
    %114 = vmatpush1.msra.mxu0 %v111
    %115 = vmatprep.subr.mxu0 0.0
    %116 = vmatpush1.msra.mxu0 0.0
    %117 = vmatprep.subr.mxu0 0.0
    %118 = vmatpush1.msra.mxu0 0.0
    %119 = vmatprep.subr.mxu0 0.0
    %120 = vmatpush1.msra.mxu0 0.0
    %121 = vmatprep.subr.mxu0 0.0
    %122 = vmatpush1.msra.mxu0 0.0
    %123 = vmatprep.subr.mxu0 0.0
    %124 = vmatpush1.msra.mxu0 0.0
    %125 = vmatprep.subr.mxu0 0.0
    %126 = vmatpush1.msra.mxu0 0.0
    %127 = vmatprep.subr.mxu0 0.0
    %128 = vmatpush1.msra.mxu0 0.0
    %129 = vmatprep.subr.mxu0 0.0
    %130 = vmatpush1.msra.mxu0 0.0
    %131 = vmatprep.subr.mxu0 0.0
    %132 = vmatpush1.msra.mxu0 0.0
    %133 = vmatprep.subr.mxu0 0.0
    %134 = vmatpush1.msra.mxu0 0.0
    %135 = vmatprep.subr.mxu0 0.0
    %136 = vmatpush1.msra.mxu0 0.0
    %137 = vmatprep.subr.mxu0 0.0
    %138 = vmatpush1.msra.mxu0 0.0
    %139 = vmatprep.subr.mxu0 0.0
    %140 = vmatpush1.msra.mxu0 0.0
    %141 = vmatprep.subr.mxu0 0.0
    %142 = vmatpush1.msra.mxu0 0.0
    %143 = vmatprep.subr.mxu0 0.0
    %144 = vmatpush1.msra.mxu0 0.0
    %145 = vmatprep.subr.mxu0 0.0
    %146 = vmatpush1.msra.mxu0 0.0
    %147 = vmatprep.subr.mxu0 0.0
    %148 = vmatpush1.msra.mxu0 0.0
    %149 = vmatprep.subr.mxu0 0.0
    %150 = vmatpush1.msra.mxu0 0.0
    %151 = vmatprep.subr.mxu0 0.0
    %152 = vmatpush1.msra.mxu0 0.0
    %153 = vmatprep.subr.mxu0 0.0
    %154 = vmatpush1.msra.mxu0 0.0
    %155 = vmatprep.subr.mxu0 0.0
    %156 = vmatpush1.msra.mxu0 0.0
    %157 = vmatprep.subr.mxu0 0.0
    %158 = vmatpush1.msra.mxu0 0.0
    %159 = vmatprep.subr.mxu0 0.0
    %160 = vmatpush1.msra.mxu0 0.0
    %161 = vmatprep.subr.mxu0 0.0
    %162 = vmatpush1.msra.mxu0 0.0
    %163 = vmatprep.subr.mxu0 0.0
    %164 = vmatpush1.msra.mxu0 0.0
    %165 = vmatprep.subr.mxu0 0.0
    %166 = vmatpush1.msra.mxu0 0.0
    %167 = vmatprep.subr.mxu0 0.0
    %168 = vmatpush1.msra.mxu0 0.0
    %169 = vmatprep.subr.mxu0 0.0
    %170 = vmatpush1.msra.mxu0 0.0
    %171 = vmatprep.subr.mxu0 0.0
    %172 = vmatpush1.msra.mxu0 0.0
    %173 = vmatprep.subr.mxu0 0.0
    %174 = vmatpush1.msra.mxu0 0.0
    %175 = vmatprep.subr.mxu0 0.0
    %176 = vmatpush1.msra.mxu0 0.0
    %177 = vmatprep.mubr.f32.mxu0 0.0
    %178 = vmatmul.mubr.f32.gmra.mrb[0].mxu0 %v108
    %v179 = vpop.f32.mrb[0].mxu0
    %v180 = vadd.f32 %v104, %v179
    %v181 = vpop.f32.mrb[0].mxu0
    %182 = vdwg.mxu0
    %v183 = vld [vmem:[%s3] sm:$0x1]
    %v185 = vlaneseq
    %v186 = vshrl.u32 %v185, 7
    %v187 = vsub.s32 0, %v186
    %v188 = vrot.slane %v183, %v187
    %v190 = vadd.f32 %v180, %v188
    %v191 = vmul.f32 %v190, 1.442695
    %v192 = vpow.pop %v191
    %vm193 = vcmask 130048
    %v194 = vsel %vm193, %v192, 0.0
    %195 = vadd.xlane.f32.xlu0 %v194
    %v196 = vpop.xlane.xlu0 %195
    %v197 = vadd.f32 %v196, 1e-06
    %v198 = vrcp.pop %v197
    %v199 = vmul.f32 %v192, %v198
    %v200 = vld [vmem:[%s4] sm:$0xff]
    %v201 = vld [vmem:[%s4 + $0x8] sm:$0xff]
    %v203 = vsel %vm193, %v199, 0
    %205 = vmatprep.subr.mxu0 0.0
    %206 = vmatpush1.msra.mxu0 %v200
    %207 = vmatprep.subr.mxu0 0.0
    %208 = vmatpush1.msra.mxu0 %v201
    %209 = vmatprep.subr.mxu0 0.0
    %210 = vmatpush1.msra.mxu0 0.0
    %211 = vmatprep.subr.mxu0 0.0
    %212 = vmatpush1.msra.mxu0 0.0
    %213 = vmatprep.subr.mxu0 0.0
    %214 = vmatpush1.msra.mxu0 0.0
    %215 = vmatprep.subr.mxu0 0.0
    %216 = vmatpush1.msra.mxu0 0.0
    %217 = vmatprep.subr.mxu0 0.0
    %218 = vmatpush1.msra.mxu0 0.0
    %219 = vmatprep.subr.mxu0 0.0
    %220 = vmatpush1.msra.mxu0 0.0
    %221 = vmatprep.subr.mxu0 0.0
    %222 = vmatpush1.msra.mxu0 0.0
    %223 = vmatprep.subr.mxu0 0.0
    %224 = vmatpush1.msra.mxu0 0.0
    %225 = vmatprep.subr.mxu0 0.0
    %226 = vmatpush1.msra.mxu0 0.0
    %227 = vmatprep.subr.mxu0 0.0
    %228 = vmatpush1.msra.mxu0 0.0
    %229 = vmatprep.subr.mxu0 0.0
    %230 = vmatpush1.msra.mxu0 0.0
    %231 = vmatprep.subr.mxu0 0.0
    %232 = vmatpush1.msra.mxu0 0.0
    %233 = vmatprep.subr.mxu0 0.0
    %234 = vmatpush1.msra.mxu0 0.0
    %235 = vmatprep.subr.mxu0 0.0
    %236 = vmatpush1.msra.mxu0 0.0
    %237 = vmatprep.subr.mxu0 0.0
    %238 = vmatpush1.msra.mxu0 0.0
    %239 = vmatprep.subr.mxu0 0.0
    %240 = vmatpush1.msra.mxu0 0.0
    %241 = vmatprep.subr.mxu0 0.0
    %242 = vmatpush1.msra.mxu0 0.0
    %243 = vmatprep.subr.mxu0 0.0
    %244 = vmatpush1.msra.mxu0 0.0
    %245 = vmatprep.subr.mxu0 0.0
    %246 = vmatpush1.msra.mxu0 0.0
    %247 = vmatprep.subr.mxu0 0.0
    %248 = vmatpush1.msra.mxu0 0.0
    %249 = vmatprep.subr.mxu0 0.0
    %250 = vmatpush1.msra.mxu0 0.0
    %251 = vmatprep.subr.mxu0 0.0
    %252 = vmatpush1.msra.mxu0 0.0
    %253 = vmatprep.subr.mxu0 0.0
    %254 = vmatpush1.msra.mxu0 0.0
    %255 = vmatprep.subr.mxu0 0.0
    %256 = vmatpush1.msra.mxu0 0.0
    %257 = vmatprep.subr.mxu0 0.0
    %258 = vmatpush1.msra.mxu0 0.0
    %259 = vmatprep.subr.mxu0 0.0
    %260 = vmatpush1.msra.mxu0 0.0
    %261 = vmatprep.subr.mxu0 0.0
    %262 = vmatpush1.msra.mxu0 0.0
    %263 = vmatprep.subr.mxu0 0.0
    %264 = vmatpush1.msra.mxu0 0.0
    %265 = vmatprep.subr.mxu0 0.0
    %266 = vmatpush1.msra.mxu0 0.0
    %267 = vmatprep.subr.mxu0 0.0
    %268 = vmatpush1.msra.mxu0 0.0
    %269 = vmatprep.mubr.f32.mxu0 0.0
    %270 = vmatmul.mubr.f32.gmra.mrb[0].mxu0 %v203
    %v271 = vpop.f32.mrb[0].mxu0
    %v272 = vadd.f32 0.0, %v271
    %v273 = vpop.f32.mrb[0].mxu0
    %274 = vdwg.mxu0
    %vm275 = vcmask 64512
    %276 = vst.msk [vmem:[#allocation2] sm:$0xff] %vm275, %v272
    %277 = vst.msk [vmem:[#allocation4] sm:$0xff] %vm193, %v192
    %278 = vst.msk [vmem:[#allocation6] sm:$0xff] %vm193, %v199
    // Predicated region
    $region22: #{tpu_custom_call.1} parent=1 // pred_check
      _
    $region23: #{tpu_custom_call.1} parent=1 // pred_check_branch
      %280 = sbr.rel (0) target = $region25
    $region24: #{tpu_custom_call.1} parent=1 // pred_region
      %s282 = ssub.s32 128, 128
      %283 = vsyncadd [#allocation3], %s282
      %s285 = sshll.u32 [#allocation2], 4
      %s286 = int_to_ptr.vmem [resolvable:$true] %s285
      %288 = dma.vmem_to_hbm [thread:$0]  %s286, 128, %s5, [#allocation3]
    $region25: #{tpu_custom_call.1} parent=1 // pred_fallthru
      _
    // Predicated region
    $region26: #{tpu_custom_call.1} parent=1 // pred_check
      _
    $region27: #{tpu_custom_call.1} parent=1 // pred_check_branch
      %290 = sbr.rel (0) target = $region29
    $region28: #{tpu_custom_call.1} parent=1 // pred_region
      %s292 = ssub.s32 128, 128
      %293 = vsyncadd [#allocation5], %s292
      %s295 = sshll.u32 [#allocation4], 4
      %s296 = int_to_ptr.vmem [resolvable:$true] %s295
      %298 = dma.vmem_to_hbm [thread:$0]  %s296, 128, %s6, [#allocation5]
    $region29: #{tpu_custom_call.1} parent=1 // pred_fallthru
      _
    // Predicated region
    $region30: #{tpu_custom_call.1} parent=1 // pred_check
      _
    $region31: #{tpu_custom_call.1} parent=1 // pred_check_branch
      %300 = sbr.rel (0) target = $region33
    $region32: #{tpu_custom_call.1} parent=1 // pred_region
      %s302 = ssub.s32 128, 128
      %303 = vsyncadd [#allocation5], %s302
      %s305 = sshll.u32 [#allocation6], 4
      %s306 = int_to_ptr.vmem [resolvable:$true] %s305
      %308 = dma.vmem_to_hbm [thread:$0]  %s306, 128, %s7, [#allocation5]
    $region33: #{tpu_custom_call.1} parent=1 // pred_fallthru
      _
    // Predicated region
    $region34: #{tpu_custom_call.1} parent=1 // pred_check
      _
    $region35: #{tpu_custom_call.1} parent=1 // pred_check_branch
      %310 = sbr.rel (0) target = $region37
    $region36: #{tpu_custom_call.1} parent=1 // pred_region
      %311 = dma.done [#allocation3], 128
    $region37: #{tpu_custom_call.1} parent=1 // pred_fallthru
      _
    // Predicated region
    $region38: #{tpu_custom_call.1} parent=1 // pred_check
      _
    $region39: #{tpu_custom_call.1} parent=1 // pred_check_branch
      %313 = sbr.rel (0) target = $region41
    $region40: #{tpu_custom_call.1} parent=1 // pred_region
      %314 = dma.done [#allocation5], 128
    $region41: #{tpu_custom_call.1} parent=1 // pred_fallthru
      _
    // Predicated region
    $region42: #{tpu_custom_call.1} parent=1 // pred_check
      _
    $region43: #{tpu_custom_call.1} parent=1 // pred_check_branch
      %316 = sbr.rel (0) target = $region45
    $region44: #{tpu_custom_call.1} parent=1 // pred_region
      %317 = dma.done [#allocation5], 128
    $region45: #{tpu_custom_call.1} parent=1 // pred_fallthru
      _
    %318 = vsyncpa [#allocation3], 1
    %319 = vsyncpa [#allocation5], 1

</llo_original>
